<compile_context>
chip_gen: v5e
topology: v5e:2x2
jax: 0.10.0
libtpu: 0.0.40
codegen_flags: <defaults>
</compile_context>

<pallas_src>
import functools

import jax
import jax.numpy as jnp
from jax.experimental import pallas as pl
from jax.experimental.pallas import tpu as pltpu


def _round_up(x, m):
    return ((x + m - 1) // m) * m


def _cdiv(a, b):
    return (a + b - 1) // b


def _choose_tiling(batch, desired_tile):
    """Pick (tile, padded_batch).

    tile is a multiple of 128, at most `desired_tile` (rounded up to 128) and
    balanced so that padding waste is bounded by ~128 rows per grid step.  For
    batches >= 256 we force >= 2 grid steps so both v7x TensorCores run
    ("parallel" dimension semantics shard the grid axis across cores).
    """
    b128 = _round_up(batch, 128)
    desired = max(128, _round_up(desired_tile, 128))
    n_steps = _cdiv(b128, desired)
    if n_steps == 1 and b128 >= 256:
        n_steps = 2
    tile = _round_up(_cdiv(b128, n_steps), 128)
    n_steps = _cdiv(b128, tile)
    return tile, n_steps * tile


def _mlp_kernel(xT_ref, w1t_ref, b1_ref, w2t_ref, b2_ref, w3t_ref, b3_ref,
                o_ref, *, state_dim, use_bf16):
    """Fused forward pass for one batch tile, feature-major layout.

    xT   : (state_dim, tile)   w1t : (128, state_dim)   b1 : (128, 1)
    h1/h2: (128, tile)         w2t : (128, 128)         b2 : (128, 1)
    out  : (1, tile)           w3t : (1, 128)           b3 : (1,) SMEM scalar
    """
    xT = xT_ref[...].astype(jnp.float32)            # mirrors x.float()

    # ---- layer 1: K = state_dim is tiny -> VPU broadcast FMAs, not MXU ----
    if state_dim <= 16:
        h1 = b1_ref[...]                             # (128, 1), broadcasts over lanes
        for k in range(state_dim):                   # static, unrolled
            h1 = h1 + w1t_ref[:, k:k + 1] * xT[k:k + 1, :]
    else:
        h1 = jnp.dot(w1t_ref[...], xT, preferred_element_type=jnp.float32)
        h1 = h1 + b1_ref[...]
    h1 = jnp.maximum(h1, 0.0)                        # ReLU, (128, tile)

    # ---- layer 2: 128x128 matmul on the MXU --------------------------------
    w2t = w2t_ref[...]
    if use_bf16:
        h2 = jnp.dot(w2t.astype(jnp.bfloat16), h1.astype(jnp.bfloat16),
                     preferred_element_type=jnp.float32)
    else:
        h2 = jnp.dot(w2t, h1, preferred_element_type=jnp.float32)
    h2 = jnp.maximum(h2 + b2_ref[...], 0.0)          # (128, tile)

    # ---- layer 3: (1,128) @ (128,tile) -> lane-dense (1, tile) output ------
    w3t = w3t_ref[...]
    if use_bf16:
        out = jnp.dot(w3t.astype(jnp.bfloat16), h2.astype(jnp.bfloat16),
                      preferred_element_type=jnp.float32)
    else:
        out = jnp.dot(w3t, h2, preferred_element_type=jnp.float32)
    o_ref[...] = (out + b3_ref[0]).astype(o_ref.dtype)


@functools.partial(jax.jit, static_argnames=("batch_tile", "use_bf16"))
def value_network_forward(x, params, batch_tile=2048, use_bf16=False):
    """x: (B, state_dim). Returns (B, 1) float32, matching ValueNetwork.forward."""
    w1, b1, w2, b2, w3, b3 = params
    B, state_dim = x.shape
    hidden = w1.shape[1]                             # 128

    tile, B_pad = _choose_tiling(B, batch_tile)
    grid = (B_pad // tile,)

    # Feature-major layout so the batch dim sits on the 128-lane axis
    # for both the input DMA and the output stores.
    xT = jnp.pad(x.T, ((0, 0), (0, B_pad - B)))      # (state_dim, B_pad)
    w1t = w1.T                                       # (hidden, state_dim)
    w2t = w2.T                                       # (hidden, hidden)
    w3t = w3.reshape(hidden, 1).T                    # (1, hidden)
    b1c = b1.reshape(hidden, 1)
    b2c = b2.reshape(hidden, 1)
    b3s = b3.reshape(1).astype(jnp.float32)          # 1-D scalar -> SMEM

    cost = pl.CostEstimate(
        flops=2 * B_pad * (state_dim * hidden + hidden * hidden + hidden),
        transcendentals=0,
        bytes_accessed=x.dtype.itemsize * B_pad * state_dim
        + 4 * (B_pad + state_dim * hidden + hidden * hidden + 3 * hidden + 1),
    )

    kernel = functools.partial(_mlp_kernel, state_dim=state_dim,
                               use_bf16=use_bf16)

    out = pl.pallas_call(
        kernel,
        out_shape=jax.ShapeDtypeStruct((1, B_pad), jnp.float32),
        grid_spec=pltpu.PrefetchScalarGridSpec(
            num_scalar_prefetch=0,
            grid=grid,
            in_specs=[
                # batch-tiled activations, lane-dense along the batch dim
                pl.BlockSpec((state_dim, tile), lambda i: (0, i)),
                # weights / biases: constant block index -> resident in VMEM
                pl.BlockSpec(w1t.shape, lambda i: (0, 0)),
                pl.BlockSpec(b1c.shape, lambda i: (0, 0)),
                pl.BlockSpec(w2t.shape, lambda i: (0, 0)),
                pl.BlockSpec(b2c.shape, lambda i: (0, 0)),
                pl.BlockSpec(w3t.shape, lambda i: (0, 0)),
                # final bias: single scalar in SMEM (1-D avoids SMEM padding)
                pl.BlockSpec(memory_space=pltpu.MemorySpace.SMEM),
            ],
            # lane-dense (1, tile) output block
            out_specs=pl.BlockSpec((1, tile), lambda i: (0, i)),
        ),
        compiler_params=pltpu.CompilerParams(
            dimension_semantics=("parallel",),
            vmem_limit_bytes=32 * 1024 * 1024,
        ),
        cost_estimate=cost,
    )(xT, w1t, b1c, w2t, b2c, w3t, b3s)

    # (1, B_pad) -> (B, 1)
    return out[:, :B].T


def init_value_network_params(key, state_dim):
    """Deterministic init mimicking nn.Linear default (uniform +-1/sqrt(fan_in))."""
    k1, k2, k3, k4, k5, k6 = jax.random.split(key, 6)

    def linear_init(kw, kb, fan_in, fan_out):
        bound = 1.0 / jnp.sqrt(jnp.float32(fan_in))
        w = jax.random.uniform(kw, (fan_in, fan_out), jnp.float32, -bound, bound)
        b = jax.random.uniform(kb, (1, fan_out), jnp.float32, -bound, bound)
        return w, b

    w1, b1 = linear_init(k1, k2, state_dim, 128)
    w2, b2 = linear_init(k3, k4, 128, 128)
    w3, b3 = linear_init(k5, k6, 128, 1)
    return (w1, b1, w2, b2, w3, b3)


def _reference_forward(x, params, use_bf16=False):
    w1, b1, w2, b2, w3, b3 = params
    x = x.astype(jnp.float32)
    h1 = jnp.maximum(x @ w1 + b1, 0.0)
    if use_bf16:
        h2 = jnp.dot(h1.astype(jnp.bfloat16), w2.astype(jnp.bfloat16),
                     preferred_element_type=jnp.float32) + b2
        h2 = jnp.maximum(h2, 0.0)
        out = jnp.dot(h2.astype(jnp.bfloat16), w3.astype(jnp.bfloat16),
                      preferred_element_type=jnp.float32) + b3
    else:
        h2 = jnp.maximum(h1 @ w2 + b2, 0.0)
        out = h2 @ w3 + b3
    return out


if __name__ == "__main__":
    state_dim = 4
    batch = 2

    key = jax.random.PRNGKey(0)
    k_params, k_x = jax.random.split(key)

    params = init_value_network_params(k_params, state_dim)
    x = jax.random.normal(k_x, (batch, state_dim), dtype=jnp.float32)

    out = jax.block_until_ready(value_network_forward(x, params))
    ref = _reference_forward(x, params)
    assert out.shape == (batch, 1), out.shape
    assert jnp.allclose(out, ref, atol=1e-4, rtol=1e-4), (out, ref)

    # batch spanning multiple grid steps (exercises padding + >=2 parallel steps)
    x_big = jax.random.normal(k_x, (1025, state_dim), dtype=jnp.float32)
    out_big = jax.block_until_ready(value_network_forward(x_big, params))
    ref_big = _reference_forward(x_big, params)
    assert out_big.shape == (1025, 1), out_big.shape
    assert jnp.allclose(out_big, ref_big, atol=1e-4, rtol=1e-4)

    # optional bf16-MXU path (v6e/v7x), checked against a bf16-mirroring reference
    out_bf16 = jax.block_until_ready(
        value_network_forward(x_big, params, use_bf16=True))
    ref_bf16 = _reference_forward(x_big, params, use_bf16=True)
    assert out_bf16.shape == (1025, 1), out_bf16.shape
    assert jnp.allclose(out_bf16, ref_bf16, atol=1e-2, rtol=1e-2)

    print("KERNEL_OK")
</pallas_src>

<mosaic_0001>
module attributes {stable_mosaic.version = 11 : i64} {
  func.func @_mlp_kernel(%arg0: i32, %arg1: memref<4x128xf32, #tpu.memory_space<vmem>>, %arg2: memref<128x4xf32, #tpu.memory_space<vmem>>, %arg3: memref<128x1xf32, #tpu.memory_space<vmem>>, %arg4: memref<128x128xf32, #tpu.memory_space<vmem>>, %arg5: memref<128x1xf32, #tpu.memory_space<vmem>>, %arg6: memref<1x128xf32, #tpu.memory_space<vmem>>, %arg7: memref<1xf32, #tpu.memory_space<smem>>, %arg8: memref<1x128xf32, #tpu.memory_space<vmem>>) attributes {dimension_semantics = [#tpu.dimension_semantics<parallel>], iteration_bounds = array<i64: 1>, scalar_prefetch = 0 : i64, scratch_operands = 0 : i64, tpu.core_type = #tpu.core_type<tc>, window_params = [{transform_indices = @transform_0, window_bounds = array<i64: 4, 128>}, {pipeline_mode = #tpu.pipeline_mode<synchronous>, transform_indices = @transform_1, window_bounds = array<i64: 128, 4>}, {pipeline_mode = #tpu.pipeline_mode<synchronous>, transform_indices = @transform_2, window_bounds = array<i64: 128, 1>}, {pipeline_mode = #tpu.pipeline_mode<synchronous>, transform_indices = @transform_3, window_bounds = array<i64: 128, 128>}, {pipeline_mode = #tpu.pipeline_mode<synchronous>, transform_indices = @transform_4, window_bounds = array<i64: 128, 1>}, {pipeline_mode = #tpu.pipeline_mode<synchronous>, transform_indices = @transform_5, window_bounds = array<i64: 1, 128>}, {transform_indices = @transform_6, window_bounds = array<i64: 1>}, {transform_indices = @transform_7, window_bounds = array<i64: 1, 128>}]} {
    %c0 = arith.constant 0 : index
    %c0_0 = arith.constant 0 : index
    %0 = vector.load %arg1[%c0, %c0_0] : memref<4x128xf32, #tpu.memory_space<vmem>>, vector<4x128xf32>
    %c0_1 = arith.constant 0 : index
    %c0_2 = arith.constant 0 : index
    %1 = vector.load %arg3[%c0_1, %c0_2] : memref<128x1xf32, #tpu.memory_space<vmem>>, vector<128x1xf32>
    %c0_3 = arith.constant 0 : index
    %c0_4 = arith.constant 0 : index
    %2 = vector.load %arg2[%c0_3, %c0_4] : memref<128x4xf32, #tpu.memory_space<vmem>>, vector<128x1xf32>
    %3 = vector.extract_strided_slice %0 {offsets = [0, 0], sizes = [1, 128], strides = [1, 1]} : vector<4x128xf32> to vector<1x128xf32>
    %4 = vector.broadcast %2 : vector<128x1xf32> to vector<128x128xf32>
    %5 = vector.broadcast %3 : vector<1x128xf32> to vector<128x128xf32>
    %6 = arith.mulf %4, %5 : vector<128x128xf32>
    %7 = vector.broadcast %1 : vector<128x1xf32> to vector<128x128xf32>
    %8 = arith.addf %7, %6 : vector<128x128xf32>
    %c0_5 = arith.constant 0 : index
    %c1 = arith.constant 1 : index
    %9 = vector.load %arg2[%c0_5, %c1] : memref<128x4xf32, #tpu.memory_space<vmem>>, vector<128x1xf32>
    %10 = vector.extract_strided_slice %0 {offsets = [1, 0], sizes = [1, 128], strides = [1, 1]} : vector<4x128xf32> to vector<1x128xf32>
    %11 = vector.broadcast %9 : vector<128x1xf32> to vector<128x128xf32>
    %12 = vector.broadcast %10 : vector<1x128xf32> to vector<128x128xf32>
    %13 = arith.mulf %11, %12 : vector<128x128xf32>
    %14 = arith.addf %8, %13 : vector<128x128xf32>
    %c0_6 = arith.constant 0 : index
    %c2 = arith.constant 2 : index
    %15 = vector.load %arg2[%c0_6, %c2] : memref<128x4xf32, #tpu.memory_space<vmem>>, vector<128x1xf32>
    %16 = vector.extract_strided_slice %0 {offsets = [2, 0], sizes = [1, 128], strides = [1, 1]} : vector<4x128xf32> to vector<1x128xf32>
    %17 = vector.broadcast %15 : vector<128x1xf32> to vector<128x128xf32>
    %18 = vector.broadcast %16 : vector<1x128xf32> to vector<128x128xf32>
    %19 = arith.mulf %17, %18 : vector<128x128xf32>
    %20 = arith.addf %14, %19 : vector<128x128xf32>
    %c0_7 = arith.constant 0 : index
    %c3 = arith.constant 3 : index
    %21 = vector.load %arg2[%c0_7, %c3] : memref<128x4xf32, #tpu.memory_space<vmem>>, vector<128x1xf32>
    %22 = vector.extract_strided_slice %0 {offsets = [3, 0], sizes = [1, 128], strides = [1, 1]} : vector<4x128xf32> to vector<1x128xf32>
    %23 = vector.broadcast %21 : vector<128x1xf32> to vector<128x128xf32>
    %24 = vector.broadcast %22 : vector<1x128xf32> to vector<128x128xf32>
    %25 = arith.mulf %23, %24 : vector<128x128xf32>
    %26 = arith.addf %20, %25 : vector<128x128xf32>
    %cst = arith.constant 0.000000e+00 : f32
    %27 = vector.broadcast %cst : f32 to vector<128x128xf32>
    %28 = arith.maximumf %26, %27 : vector<128x128xf32>
    %c0_8 = arith.constant 0 : index
    %c0_9 = arith.constant 0 : index
    %29 = vector.load %arg4[%c0_8, %c0_9] : memref<128x128xf32, #tpu.memory_space<vmem>>, vector<128x128xf32>
    %cst_10 = arith.constant dense<0.000000e+00> : vector<128x128xf32>
    %30 = tpu.matmul %29, %28, %cst_10 {dimension_numbers = #tpu.dot_dimension_numbers<[1], [0], [0], [1], [0, 0, 1, 1], [], []>} : vector<128x128xf32>, vector<128x128xf32>, vector<128x128xf32> -> vector<128x128xf32>
    %c0_11 = arith.constant 0 : index
    %c0_12 = arith.constant 0 : index
    %31 = vector.load %arg5[%c0_11, %c0_12] : memref<128x1xf32, #tpu.memory_space<vmem>>, vector<128x1xf32>
    %32 = vector.broadcast %31 : vector<128x1xf32> to vector<128x128xf32>
    %33 = arith.addf %30, %32 : vector<128x128xf32>
    %cst_13 = arith.constant 0.000000e+00 : f32
    %34 = vector.broadcast %cst_13 : f32 to vector<128x128xf32>
    %35 = arith.maximumf %33, %34 : vector<128x128xf32>
    %c0_14 = arith.constant 0 : index
    %c0_15 = arith.constant 0 : index
    %36 = vector.load %arg6[%c0_14, %c0_15] : memref<1x128xf32, #tpu.memory_space<vmem>>, vector<1x128xf32>
    %cst_16 = arith.constant dense<0.000000e+00> : vector<1x128xf32>
    %37 = tpu.matmul %36, %35, %cst_16 {dimension_numbers = #tpu.dot_dimension_numbers<[1], [0], [0], [1], [0, 0, 1, 1], [], []>} : vector<1x128xf32>, vector<128x128xf32>, vector<1x128xf32> -> vector<1x128xf32>
    %c0_17 = arith.constant 0 : index
    %38 = memref.load %arg7[%c0_17] : memref<1xf32, #tpu.memory_space<smem>>
    %39 = vector.broadcast %38 : f32 to vector<1x128xf32>
    %40 = arith.addf %37, %39 : vector<1x128xf32>
    %c0_18 = arith.constant 0 : index
    %c0_19 = arith.constant 0 : index
    %41 = vector.load %arg8[%c0_18, %c0_19] : memref<1x128xf32, #tpu.memory_space<vmem>>, vector<1x128xf32>
    tpu.vector_store %arg8[%c0_18, %c0_19], %40 {strides = array<i32>} : memref<1x128xf32, #tpu.memory_space<vmem>>, vector<1x128xf32>,
    return
  }
  func.func @transform_0(%arg0: i32) -> (i32, i32) {
    %c0_i32 = arith.constant 0 : i32
    %c0_i32_0 = arith.constant 0 : i32
    return %c0_i32, %arg0 : i32, i32
  }
  func.func @transform_1(%arg0: i32) -> (i32, i32) {
    %c0_i32 = arith.constant 0 : i32
    %c0_i32_0 = arith.constant 0 : i32
    %c0_i32_1 = arith.constant 0 : i32
    return %c0_i32, %c0_i32_0 : i32, i32
  }
  func.func @transform_2(%arg0: i32) -> (i32, i32) {
    %c0_i32 = arith.constant 0 : i32
    %c0_i32_0 = arith.constant 0 : i32
    %c0_i32_1 = arith.constant 0 : i32
    return %c0_i32, %c0_i32_0 : i32, i32
  }
  func.func @transform_3(%arg0: i32) -> (i32, i32) {
    %c0_i32 = arith.constant 0 : i32
    %c0_i32_0 = arith.constant 0 : i32
    %c0_i32_1 = arith.constant 0 : i32
    return %c0_i32, %c0_i32_0 : i32, i32
  }
  func.func @transform_4(%arg0: i32) -> (i32, i32) {
    %c0_i32 = arith.constant 0 : i32
    %c0_i32_0 = arith.constant 0 : i32
    %c0_i32_1 = arith.constant 0 : i32
    return %c0_i32, %c0_i32_0 : i32, i32
  }
  func.func @transform_5(%arg0: i32) -> (i32, i32) {
    %c0_i32 = arith.constant 0 : i32
    %c0_i32_0 = arith.constant 0 : i32
    %c0_i32_1 = arith.constant 0 : i32
    return %c0_i32, %c0_i32_0 : i32, i32
  }
  func.func @transform_6(%arg0: i32) -> i32 {
    %c0_i32 = arith.constant 0 : i32
    %c0_i32_0 = arith.constant 0 : i32
    return %c0_i32 : i32
  }
  func.func @transform_7(%arg0: i32) -> (i32, i32) {
    %c0_i32 = arith.constant 0 : i32
    %c0_i32_0 = arith.constant 0 : i32
    return %c0_i32, %arg0 : i32, i32
  }
}

</mosaic_0001>

<llo_original>
// kernel: value_network_forward.1
$region0: #{value_network_forward.1}
  #allocation0 [shape = 'u32[]', space=smem, size = 0x4, offset = 0x4, fixed_abs, tag = 'smem constant byte address 0x4 - core index']
  #allocation1 [shape = 'u32[72,128]{1,0:T(1,128)}', space=vmem, size = 0x9000, scoped, tag = 'internal scratch']
  #allocation2 [shape = 'f32[1]{0:T(128)S(6)}', space=smem, size = 0x200, scoped, tag = 'scoped memory for value_network_forward.1']
  %s0 = inlined_call_operand.vmem [shape: f32[4,128], index: 0, kind: input, shape index: {}]
  %s1 = inlined_call_operand.vmem [shape: f32[128,4], index: 1, kind: input, shape index: {}]
  %s2 = inlined_call_operand.vmem [shape: f32[128,1], index: 2, kind: input, shape index: {}]
  %s3 = inlined_call_operand.vmem [shape: f32[128,128], index: 3, kind: input, shape index: {}]
  %s4 = inlined_call_operand.vmem [shape: f32[128,1], index: 4, kind: input, shape index: {}]
  %s5 = inlined_call_operand.vmem [shape: f32[1,128], index: 5, kind: input, shape index: {}]
  %s6 = inlined_call_operand.<no memory space> [shape: f32[1], index: 6, kind: input, shape index: {}]
  %s7 = inlined_call_operand.vmem [shape: f32[1,128], index: 7, kind: output, shape index: {}]
  %s8 = sld [smem:[#allocation0]]
  $region38: #{value_network_forward.1} parent=0
    _
  %s10 = ssub.s32 1, %s8
  %s11 = scalar_select 0, %s10, %s8
  %12 = sst [smem:[#allocation2]] %s6
  // Predicated region
  $region2: #{value_network_forward.1} parent=0 // pred_check
    _
  $region3: #{value_network_forward.1} parent=0 // pred_check_branch
    %14 = sbr.rel (0) target = $region5
  $region4: #{value_network_forward.1} parent=0 // pred_region
    _
  $region5: #{value_network_forward.1} parent=0 // pred_fallthru
    _
  // Predicated region
  $region6: #{value_network_forward.1} parent=0 // pred_check
    _
  $region7: #{value_network_forward.1} parent=0 // pred_check_branch
    %16 = sbr.rel (0) target = $region9
  $region8: #{value_network_forward.1} parent=0 // pred_region
    _
  $region9: #{value_network_forward.1} parent=0 // pred_fallthru
    _
  // Predicated region
  $region10: #{value_network_forward.1} parent=0 // pred_check
    _
  $region11: #{value_network_forward.1} parent=0 // pred_check_branch
    %18 = sbr.rel (0) target = $region13
  $region12: #{value_network_forward.1} parent=0 // pred_region
    _
  $region13: #{value_network_forward.1} parent=0 // pred_fallthru
    _
  // Predicated region
  $region14: #{value_network_forward.1} parent=0 // pred_check
    _
  $region15: #{value_network_forward.1} parent=0 // pred_check_branch
    %20 = sbr.rel (0) target = $region17
  $region16: #{value_network_forward.1} parent=0 // pred_region
    _
  $region17: #{value_network_forward.1} parent=0 // pred_fallthru
    _
  // Predicated region
  $region18: #{value_network_forward.1} parent=0 // pred_check
    _
  $region19: #{value_network_forward.1} parent=0 // pred_check_branch
    %22 = sbr.rel (0) target = $region21
  $region20: #{value_network_forward.1} parent=0 // pred_region
    _
  $region21: #{value_network_forward.1} parent=0 // pred_fallthru
    _
  // Predicated region
  $region22: #{value_network_forward.1} parent=0 // pred_check
    _
  $region23: #{value_network_forward.1} parent=0 // pred_check_branch
    %24 = sbr.rel (0) target = $region25
  $region24: #{value_network_forward.1} parent=0 // pred_region
    _
  $region25: #{value_network_forward.1} parent=0 // pred_fallthru
    _
  // Predicated region
  $region26: #{value_network_forward.1} parent=0 // pred_check
    _
  $region27: #{value_network_forward.1} parent=0 // pred_check_branch
    %26 = sbr.rel (0) target = $region29
  $region28: #{value_network_forward.1} parent=0 // pred_region
    _
  $region29: #{value_network_forward.1} parent=0 // pred_fallthru
    _
  %v27 = vld [vmem:[%s0] sm:$0xf]
  %v28 = vld [vmem:[%s2] sm:$0xff]
  %v29 = vld [vmem:[%s2 + $0x8] sm:$0xff]
  %v30 = vld [vmem:[%s2 + $0x10] sm:$0xff]
  %v31 = vld [vmem:[%s2 + $0x18] sm:$0xff]
  %v32 = vld [vmem:[%s2 + $0x20] sm:$0xff]
  %v33 = vld [vmem:[%s2 + $0x28] sm:$0xff]
  %v34 = vld [vmem:[%s2 + $0x30] sm:$0xff]
  %v35 = vld [vmem:[%s2 + $0x38] sm:$0xff]
  %v36 = vld [vmem:[%s2 + $0x40] sm:$0xff]
  %v37 = vld [vmem:[%s2 + $0x48] sm:$0xff]
  %v38 = vld [vmem:[%s2 + $0x50] sm:$0xff]
  %v39 = vld [vmem:[%s2 + $0x58] sm:$0xff]
  %v40 = vld [vmem:[%s2 + $0x60] sm:$0xff]
  %v41 = vld [vmem:[%s2 + $0x68] sm:$0xff]
  %v42 = vld [vmem:[%s2 + $0x70] sm:$0xff]
  %v43 = vld [vmem:[%s2 + $0x78] sm:$0xff]
  %v44 = vld [vmem:[%s1] sm:$0xff]
  %v45 = vld [vmem:[%s1 + $0x8] sm:$0xff]
  %v46 = vld [vmem:[%s1 + $0x10] sm:$0xff]
  %v47 = vld [vmem:[%s1 + $0x18] sm:$0xff]
  %v48 = vld [vmem:[%s1 + $0x20] sm:$0xff]
  %v49 = vld [vmem:[%s1 + $0x28] sm:$0xff]
  %v50 = vld [vmem:[%s1 + $0x30] sm:$0xff]
  %v51 = vld [vmem:[%s1 + $0x38] sm:$0xff]
  %v52 = vld [vmem:[%s1 + $0x40] sm:$0xff]
  %v53 = vld [vmem:[%s1 + $0x48] sm:$0xff]
  %v54 = vld [vmem:[%s1 + $0x50] sm:$0xff]
  %v55 = vld [vmem:[%s1 + $0x58] sm:$0xff]
  %v56 = vld [vmem:[%s1 + $0x60] sm:$0xff]
  %v57 = vld [vmem:[%s1 + $0x68] sm:$0xff]
  %v58 = vld [vmem:[%s1 + $0x70] sm:$0xff]
  %v59 = vld [vmem:[%s1 + $0x78] sm:$0xff]
  %61 = vset.pattern.permute.xlu0 0
  %62 = vperm.xlu0 %61, %v44
  %v63 = vpop.permute.xlu0 %62
  %66 = vset.pattern.permute.xlu0 0
  %67 = vperm.xlu0 %66, %v45
  %v68 = vpop.permute.xlu0 %67
  %71 = vset.pattern.permute.xlu0 0
  %72 = vperm.xlu0 %71, %v46
  %v73 = vpop.permute.xlu0 %72
  %76 = vset.pattern.permute.xlu0 0
  %77 = vperm.xlu0 %76, %v47
  %v78 = vpop.permute.xlu0 %77
  %81 = vset.pattern.permute.xlu0 0
  %82 = vperm.xlu0 %81, %v48
  %v83 = vpop.permute.xlu0 %82
  %86 = vset.pattern.permute.xlu0 0
  %87 = vperm.xlu0 %86, %v49
  %v88 = vpop.permute.xlu0 %87
  %91 = vset.pattern.permute.xlu0 0
  %92 = vperm.xlu0 %91, %v50
  %v93 = vpop.permute.xlu0 %92
  %96 = vset.pattern.permute.xlu0 0
  %97 = vperm.xlu0 %96, %v51
  %v98 = vpop.permute.xlu0 %97
  %101 = vset.pattern.permute.xlu0 0
  %102 = vperm.xlu0 %101, %v52
  %v103 = vpop.permute.xlu0 %102
  %106 = vset.pattern.permute.xlu0 0
  %107 = vperm.xlu0 %106, %v53
  %v108 = vpop.permute.xlu0 %107
  %111 = vset.pattern.permute.xlu0 0
  %112 = vperm.xlu0 %111, %v54
  %v113 = vpop.permute.xlu0 %112
  %116 = vset.pattern.permute.xlu0 0
  %117 = vperm.xlu0 %116, %v55
  %v118 = vpop.permute.xlu0 %117
  %121 = vset.pattern.permute.xlu0 0
  %122 = vperm.xlu0 %121, %v56
  %v123 = vpop.permute.xlu0 %122
  %126 = vset.pattern.permute.xlu0 0
  %127 = vperm.xlu0 %126, %v57
  %v128 = vpop.permute.xlu0 %127
  %131 = vset.pattern.permute.xlu0 0
  %132 = vperm.xlu0 %131, %v58
  %v133 = vpop.permute.xlu0 %132
  %136 = vset.pattern.permute.xlu0 0
  %137 = vperm.xlu0 %136, %v59
  %v138 = vpop.permute.xlu0 %137
  %v140 = vperm.slane %v27, 0
  %v141 = vmul.f32 %v63, %v140
  %v142 = vmul.f32 %v68, %v140
  %v143 = vmul.f32 %v73, %v140
  %v144 = vmul.f32 %v78, %v140
  %v145 = vmul.f32 %v83, %v140
  %v146 = vmul.f32 %v88, %v140
  %v147 = vmul.f32 %v93, %v140
  %v148 = vmul.f32 %v98, %v140
  %v149 = vmul.f32 %v103, %v140
  %v150 = vmul.f32 %v108, %v140
  %v151 = vmul.f32 %v113, %v140
  %v152 = vmul.f32 %v118, %v140
  %v153 = vmul.f32 %v123, %v140
  %v154 = vmul.f32 %v128, %v140
  %v155 = vmul.f32 %v133, %v140
  %v156 = vmul.f32 %v138, %v140
  %158 = vset.pattern.permute.xlu0 0
  %159 = vperm.xlu0 %158, %v28
  %v160 = vpop.permute.xlu0 %159
  %163 = vset.pattern.permute.xlu0 0
  %164 = vperm.xlu0 %163, %v29
  %v165 = vpop.permute.xlu0 %164
  %168 = vset.pattern.permute.xlu0 0
  %169 = vperm.xlu0 %168, %v30
  %v170 = vpop.permute.xlu0 %169
  %173 = vset.pattern.permute.xlu0 0
  %174 = vperm.xlu0 %173, %v31
  %v175 = vpop.permute.xlu0 %174
  %178 = vset.pattern.permute.xlu0 0
  %179 = vperm.xlu0 %178, %v32
  %v180 = vpop.permute.xlu0 %179
  %183 = vset.pattern.permute.xlu0 0
  %184 = vperm.xlu0 %183, %v33
  %v185 = vpop.permute.xlu0 %184
  %188 = vset.pattern.permute.xlu0 0
  %189 = vperm.xlu0 %188, %v34
  %v190 = vpop.permute.xlu0 %189
  %193 = vset.pattern.permute.xlu0 0
  %194 = vperm.xlu0 %193, %v35
  %v195 = vpop.permute.xlu0 %194
  %198 = vset.pattern.permute.xlu0 0
  %199 = vperm.xlu0 %198, %v36
  %v200 = vpop.permute.xlu0 %199
  %203 = vset.pattern.permute.xlu0 0
  %204 = vperm.xlu0 %203, %v37
  %v205 = vpop.permute.xlu0 %204
  %208 = vset.pattern.permute.xlu0 0
  %209 = vperm.xlu0 %208, %v38
  %v210 = vpop.permute.xlu0 %209
  %213 = vset.pattern.permute.xlu0 0
  %214 = vperm.xlu0 %213, %v39
  %v215 = vpop.permute.xlu0 %214
  %218 = vset.pattern.permute.xlu0 0
  %219 = vperm.xlu0 %218, %v40
  %v220 = vpop.permute.xlu0 %219
  %223 = vset.pattern.permute.xlu0 0
  %224 = vperm.xlu0 %223, %v41
  %v225 = vpop.permute.xlu0 %224
  %228 = vset.pattern.permute.xlu0 0
  %229 = vperm.xlu0 %228, %v42
  %v230 = vpop.permute.xlu0 %229
  %233 = vset.pattern.permute.xlu0 0
  %234 = vperm.xlu0 %233, %v43
  %v235 = vpop.permute.xlu0 %234
  %v237 = vadd.f32 %v160, %v141
  %v238 = vadd.f32 %v165, %v142
  %v239 = vadd.f32 %v170, %v143
  %v240 = vadd.f32 %v175, %v144
  %v241 = vadd.f32 %v180, %v145
  %v242 = vadd.f32 %v185, %v146
  %v243 = vadd.f32 %v190, %v147
  %v244 = vadd.f32 %v195, %v148
  %v245 = vadd.f32 %v200, %v149
  %v246 = vadd.f32 %v205, %v150
  %v247 = vadd.f32 %v210, %v151
  %v248 = vadd.f32 %v215, %v152
  %v249 = vadd.f32 %v220, %v153
  %v250 = vadd.f32 %v225, %v154
  %v251 = vadd.f32 %v230, %v155
  %v252 = vadd.f32 %v235, %v156
  %253 = vset.pattern.permute.xlu0 1
  %254 = vperm.xlu0 %253, %v44
  %v255 = vpop.permute.xlu0 %254
  %257 = vset.pattern.permute.xlu0 1
  %258 = vperm.xlu0 %257, %v45
  %v259 = vpop.permute.xlu0 %258
  %261 = vset.pattern.permute.xlu0 1
  %262 = vperm.xlu0 %261, %v46
  %v263 = vpop.permute.xlu0 %262
  %265 = vset.pattern.permute.xlu0 1
  %266 = vperm.xlu0 %265, %v47
  %v267 = vpop.permute.xlu0 %266
  %269 = vset.pattern.permute.xlu0 1
  %270 = vperm.xlu0 %269, %v48
  %v271 = vpop.permute.xlu0 %270
  %273 = vset.pattern.permute.xlu0 1
  %274 = vperm.xlu0 %273, %v49
  %v275 = vpop.permute.xlu0 %274
  %277 = vset.pattern.permute.xlu0 1
  %278 = vperm.xlu0 %277, %v50
  %v279 = vpop.permute.xlu0 %278
  %281 = vset.pattern.permute.xlu0 1
  %282 = vperm.xlu0 %281, %v51
  %v283 = vpop.permute.xlu0 %282
  %285 = vset.pattern.permute.xlu0 1
  %286 = vperm.xlu0 %285, %v52
  %v287 = vpop.permute.xlu0 %286
  %289 = vset.pattern.permute.xlu0 1
  %290 = vperm.xlu0 %289, %v53
  %v291 = vpop.permute.xlu0 %290
  %293 = vset.pattern.permute.xlu0 1
  %294 = vperm.xlu0 %293, %v54
  %v295 = vpop.permute.xlu0 %294
  %297 = vset.pattern.permute.xlu0 1
  %298 = vperm.xlu0 %297, %v55
  %v299 = vpop.permute.xlu0 %298
  %301 = vset.pattern.permute.xlu0 1
  %302 = vperm.xlu0 %301, %v56
  %v303 = vpop.permute.xlu0 %302
  %305 = vset.pattern.permute.xlu0 1
  %306 = vperm.xlu0 %305, %v57
  %v307 = vpop.permute.xlu0 %306
  %309 = vset.pattern.permute.xlu0 1
  %310 = vperm.xlu0 %309, %v58
  %v311 = vpop.permute.xlu0 %310
  %313 = vset.pattern.permute.xlu0 1
  %314 = vperm.xlu0 %313, %v59
  %v315 = vpop.permute.xlu0 %314
  %v317 = vperm.slane %v27, 1
  %v318 = vmul.f32 %v255, %v317
  %v319 = vmul.f32 %v259, %v317
  %v320 = vmul.f32 %v263, %v317
  %v321 = vmul.f32 %v267, %v317
  %v322 = vmul.f32 %v271, %v317
  %v323 = vmul.f32 %v275, %v317
  %v324 = vmul.f32 %v279, %v317
  %v325 = vmul.f32 %v283, %v317
  %v326 = vmul.f32 %v287, %v317
  %v327 = vmul.f32 %v291, %v317
  %v328 = vmul.f32 %v295, %v317
  %v329 = vmul.f32 %v299, %v317
  %v330 = vmul.f32 %v303, %v317
  %v331 = vmul.f32 %v307, %v317
  %v332 = vmul.f32 %v311, %v317
  %v333 = vmul.f32 %v315, %v317
  %v334 = vadd.f32 %v237, %v318
  %v335 = vadd.f32 %v238, %v319
  %v336 = vadd.f32 %v239, %v320
  %v337 = vadd.f32 %v240, %v321
  %v338 = vadd.f32 %v241, %v322
  %v339 = vadd.f32 %v242, %v323
  %v340 = vadd.f32 %v243, %v324
  %v341 = vadd.f32 %v244, %v325
  %v342 = vadd.f32 %v245, %v326
  %v343 = vadd.f32 %v246, %v327
  %v344 = vadd.f32 %v247, %v328
  %v345 = vadd.f32 %v248, %v329
  %v346 = vadd.f32 %v249, %v330
  %v347 = vadd.f32 %v250, %v331
  %v348 = vadd.f32 %v251, %v332
  %v349 = vadd.f32 %v252, %v333
  %350 = vset.pattern.permute.xlu0 2
  %351 = vperm.xlu0 %350, %v44
  %v352 = vpop.permute.xlu0 %351
  %354 = vset.pattern.permute.xlu0 2
  %355 = vperm.xlu0 %354, %v45
  %v356 = vpop.permute.xlu0 %355
  %358 = vset.pattern.permute.xlu0 2
  %359 = vperm.xlu0 %358, %v46
  %v360 = vpop.permute.xlu0 %359
  %362 = vset.pattern.permute.xlu0 2
  %363 = vperm.xlu0 %362, %v47
  %v364 = vpop.permute.xlu0 %363
  %366 = vset.pattern.permute.xlu0 2
  %367 = vperm.xlu0 %366, %v48
  %v368 = vpop.permute.xlu0 %367
  %370 = vset.pattern.permute.xlu0 2
  %371 = vperm.xlu0 %370, %v49
  %v372 = vpop.permute.xlu0 %371
  %374 = vset.pattern.permute.xlu0 2
  %375 = vperm.xlu0 %374, %v50
  %v376 = vpop.permute.xlu0 %375
  %378 = vset.pattern.permute.xlu0 2
  %379 = vperm.xlu0 %378, %v51
  %v380 = vpop.permute.xlu0 %379
  %382 = vset.pattern.permute.xlu0 2
  %383 = vperm.xlu0 %382, %v52
  %v384 = vpop.permute.xlu0 %383
  %386 = vset.pattern.permute.xlu0 2
  %387 = vperm.xlu0 %386, %v53
  %v388 = vpop.permute.xlu0 %387
  %390 = vset.pattern.permute.xlu0 2
  %391 = vperm.xlu0 %390, %v54
  %v392 = vpop.permute.xlu0 %391
  %394 = vset.pattern.permute.xlu0 2
  %395 = vperm.xlu0 %394, %v55
  %v396 = vpop.permute.xlu0 %395
  %398 = vset.pattern.permute.xlu0 2
  %399 = vperm.xlu0 %398, %v56
  %v400 = vpop.permute.xlu0 %399
  %402 = vset.pattern.permute.xlu0 2
  %403 = vperm.xlu0 %402, %v57
  %v404 = vpop.permute.xlu0 %403
  %406 = vset.pattern.permute.xlu0 2
  %407 = vperm.xlu0 %406, %v58
  %v408 = vpop.permute.xlu0 %407
  %410 = vset.pattern.permute.xlu0 2
  %411 = vperm.xlu0 %410, %v59
  %v412 = vpop.permute.xlu0 %411
  %v414 = vperm.slane %v27, 2
  %v415 = vmul.f32 %v352, %v414
  %v416 = vmul.f32 %v356, %v414
  %v417 = vmul.f32 %v360, %v414
  %v418 = vmul.f32 %v364, %v414
  %v419 = vmul.f32 %v368, %v414
  %v420 = vmul.f32 %v372, %v414
  %v421 = vmul.f32 %v376, %v414
  %v422 = vmul.f32 %v380, %v414
  %v423 = vmul.f32 %v384, %v414
  %v424 = vmul.f32 %v388, %v414
  %v425 = vmul.f32 %v392, %v414
  %v426 = vmul.f32 %v396, %v414
  %v427 = vmul.f32 %v400, %v414
  %v428 = vmul.f32 %v404, %v414
  %v429 = vmul.f32 %v408, %v414
  %v430 = vmul.f32 %v412, %v414
  %v431 = vadd.f32 %v334, %v415
  %v432 = vadd.f32 %v335, %v416
  %v433 = vadd.f32 %v336, %v417
  %v434 = vadd.f32 %v337, %v418
  %v435 = vadd.f32 %v338, %v419
  %v436 = vadd.f32 %v339, %v420
  %v437 = vadd.f32 %v340, %v421
  %v438 = vadd.f32 %v341, %v422
  %v439 = vadd.f32 %v342, %v423
  %v440 = vadd.f32 %v343, %v424
  %v441 = vadd.f32 %v344, %v425
  %v442 = vadd.f32 %v345, %v426
  %v443 = vadd.f32 %v346, %v427
  %v444 = vadd.f32 %v347, %v428
  %v445 = vadd.f32 %v348, %v429
  %v446 = vadd.f32 %v349, %v430
  %447 = vset.pattern.permute.xlu0 3
  %448 = vperm.xlu0 %447, %v44
  %v449 = vpop.permute.xlu0 %448
  %451 = vset.pattern.permute.xlu0 3
  %452 = vperm.xlu0 %451, %v45
  %v453 = vpop.permute.xlu0 %452
  %455 = vset.pattern.permute.xlu0 3
  %456 = vperm.xlu0 %455, %v46
  %v457 = vpop.permute.xlu0 %456
  %459 = vset.pattern.permute.xlu0 3
  %460 = vperm.xlu0 %459, %v47
  %v461 = vpop.permute.xlu0 %460
  %463 = vset.pattern.permute.xlu0 3
  %464 = vperm.xlu0 %463, %v48
  %v465 = vpop.permute.xlu0 %464
  %467 = vset.pattern.permute.xlu0 3
  %468 = vperm.xlu0 %467, %v49
  %v469 = vpop.permute.xlu0 %468
  %471 = vset.pattern.permute.xlu0 3
  %472 = vperm.xlu0 %471, %v50
  %v473 = vpop.permute.xlu0 %472
  %475 = vset.pattern.permute.xlu0 3
  %476 = vperm.xlu0 %475, %v51
  %v477 = vpop.permute.xlu0 %476
  %479 = vset.pattern.permute.xlu0 3
  %480 = vperm.xlu0 %479, %v52
  %v481 = vpop.permute.xlu0 %480
  %483 = vset.pattern.permute.xlu0 3
  %484 = vperm.xlu0 %483, %v53
  %v485 = vpop.permute.xlu0 %484
  %487 = vset.pattern.permute.xlu0 3
  %488 = vperm.xlu0 %487, %v54
  %v489 = vpop.permute.xlu0 %488
  %491 = vset.pattern.permute.xlu0 3
  %492 = vperm.xlu0 %491, %v55
  %v493 = vpop.permute.xlu0 %492
  %495 = vset.pattern.permute.xlu0 3
  %496 = vperm.xlu0 %495, %v56
  %v497 = vpop.permute.xlu0 %496
  %499 = vset.pattern.permute.xlu0 3
  %500 = vperm.xlu0 %499, %v57
  %v501 = vpop.permute.xlu0 %500
  %503 = vset.pattern.permute.xlu0 3
  %504 = vperm.xlu0 %503, %v58
  %v505 = vpop.permute.xlu0 %504
  %507 = vset.pattern.permute.xlu0 3
  %508 = vperm.xlu0 %507, %v59
  %v509 = vpop.permute.xlu0 %508
  %v511 = vperm.slane %v27, 3
  %v512 = vmul.f32 %v449, %v511
  %v513 = vmul.f32 %v453, %v511
  %v514 = vmul.f32 %v457, %v511
  %v515 = vmul.f32 %v461, %v511
  %v516 = vmul.f32 %v465, %v511
  %v517 = vmul.f32 %v469, %v511
  %v518 = vmul.f32 %v473, %v511
  %v519 = vmul.f32 %v477, %v511
  %v520 = vmul.f32 %v481, %v511
  %v521 = vmul.f32 %v485, %v511
  %v522 = vmul.f32 %v489, %v511
  %v523 = vmul.f32 %v493, %v511
  %v524 = vmul.f32 %v497, %v511
  %v525 = vmul.f32 %v501, %v511
  %v526 = vmul.f32 %v505, %v511
  %v527 = vmul.f32 %v509, %v511
  %v528 = vadd.f32 %v431, %v512
  %v529 = vadd.f32 %v432, %v513
  %v530 = vadd.f32 %v433, %v514
  %v531 = vadd.f32 %v434, %v515
  %v532 = vadd.f32 %v435, %v516
  %v533 = vadd.f32 %v436, %v517
  %v534 = vadd.f32 %v437, %v518
  %v535 = vadd.f32 %v438, %v519
  %v536 = vadd.f32 %v439, %v520
  %v537 = vadd.f32 %v440, %v521
  %v538 = vadd.f32 %v441, %v522
  %v539 = vadd.f32 %v442, %v523
  %v540 = vadd.f32 %v443, %v524
  %v541 = vadd.f32 %v444, %v525
  %v542 = vadd.f32 %v445, %v526
  %v543 = vadd.f32 %v446, %v527
  %v544 = vmax.f32 %v528, 0.0
  %v545 = vmax.f32 %v529, 0.0
  %v546 = vmax.f32 %v530, 0.0
  %v547 = vmax.f32 %v531, 0.0
  %v548 = vmax.f32 %v532, 0.0
  %v549 = vmax.f32 %v533, 0.0
  %v550 = vmax.f32 %v534, 0.0
  %v551 = vmax.f32 %v535, 0.0
  %v552 = vmax.f32 %v536, 0.0
  %v553 = vmax.f32 %v537, 0.0
  %v554 = vmax.f32 %v538, 0.0
  %v555 = vmax.f32 %v539, 0.0
  %v556 = vmax.f32 %v540, 0.0
  %v557 = vmax.f32 %v541, 0.0
  %v558 = vmax.f32 %v542, 0.0
  %v559 = vmax.f32 %v543, 0.0
  %v560 = vld [vmem:[%s3] sm:$0xff]
  %v561 = vld [vmem:[%s3 + $0x8] sm:$0xff]
  %v562 = vld [vmem:[%s3 + $0x10] sm:$0xff]
  %v563 = vld [vmem:[%s3 + $0x18] sm:$0xff]
  %v564 = vld [vmem:[%s3 + $0x20] sm:$0xff]
  %v565 = vld [vmem:[%s3 + $0x28] sm:$0xff]
  %v566 = vld [vmem:[%s3 + $0x30] sm:$0xff]
  %v567 = vld [vmem:[%s3 + $0x38] sm:$0xff]
  %v568 = vld [vmem:[%s3 + $0x40] sm:$0xff]
  %v569 = vld [vmem:[%s3 + $0x48] sm:$0xff]
  %v570 = vld [vmem:[%s3 + $0x50] sm:$0xff]
  %v571 = vld [vmem:[%s3 + $0x58] sm:$0xff]
  %v572 = vld [vmem:[%s3 + $0x60] sm:$0xff]
  %v573 = vld [vmem:[%s3 + $0x68] sm:$0xff]
  %v574 = vld [vmem:[%s3 + $0x70] sm:$0xff]
  %v575 = vld [vmem:[%s3 + $0x78] sm:$0xff]
  %v576 = vld [vmem:[%s4] sm:$0xff]
  %v577 = vld [vmem:[%s4 + $0x8] sm:$0xff]
  %v578 = vld [vmem:[%s4 + $0x10] sm:$0xff]
  %v579 = vld [vmem:[%s4 + $0x18] sm:$0xff]
  %v580 = vld [vmem:[%s4 + $0x20] sm:$0xff]
  %v581 = vld [vmem:[%s4 + $0x28] sm:$0xff]
  %v582 = vld [vmem:[%s4 + $0x30] sm:$0xff]
  %v583 = vld [vmem:[%s4 + $0x38] sm:$0xff]
  %v584 = vld [vmem:[%s4 + $0x40] sm:$0xff]
  %v585 = vld [vmem:[%s4 + $0x48] sm:$0xff]
  %v586 = vld [vmem:[%s4 + $0x50] sm:$0xff]
  %v587 = vld [vmem:[%s4 + $0x58] sm:$0xff]
  %v588 = vld [vmem:[%s4 + $0x60] sm:$0xff]
  %v589 = vld [vmem:[%s4 + $0x68] sm:$0xff]
  %v590 = vld [vmem:[%s4 + $0x70] sm:$0xff]
  %v591 = vld [vmem:[%s4 + $0x78] sm:$0xff]
  %593 = vset.pattern.permute.xlu0 0
  %594 = vperm.xlu0 %593, %v576
  %v595 = vpop.permute.xlu0 %594
  %598 = vset.pattern.permute.xlu0 0
  %599 = vperm.xlu0 %598, %v577
  %v600 = vpop.permute.xlu0 %599
  %603 = vset.pattern.permute.xlu0 0
  %604 = vperm.xlu0 %603, %v578
  %v605 = vpop.permute.xlu0 %604
  %608 = vset.pattern.permute.xlu0 0
  %609 = vperm.xlu0 %608, %v579
  %v610 = vpop.permute.xlu0 %609
  %613 = vset.pattern.permute.xlu0 0
  %614 = vperm.xlu0 %613, %v580
  %v615 = vpop.permute.xlu0 %614
  %618 = vset.pattern.permute.xlu0 0
  %619 = vperm.xlu0 %618, %v581
  %v620 = vpop.permute.xlu0 %619
  %623 = vset.pattern.permute.xlu0 0
  %624 = vperm.xlu0 %623, %v582
  %v625 = vpop.permute.xlu0 %624
  %628 = vset.pattern.permute.xlu0 0
  %629 = vperm.xlu0 %628, %v583
  %v630 = vpop.permute.xlu0 %629
  %633 = vset.pattern.permute.xlu0 0
  %634 = vperm.xlu0 %633, %v584
  %v635 = vpop.permute.xlu0 %634
  %638 = vset.pattern.permute.xlu0 0
  %639 = vperm.xlu0 %638, %v585
  %v640 = vpop.permute.xlu0 %639
  %643 = vset.pattern.permute.xlu0 0
  %644 = vperm.xlu0 %643, %v586
  %v645 = vpop.permute.xlu0 %644
  %648 = vset.pattern.permute.xlu0 0
  %649 = vperm.xlu0 %648, %v587
  %v650 = vpop.permute.xlu0 %649
  %653 = vset.pattern.permute.xlu0 0
  %654 = vperm.xlu0 %653, %v588
  %v655 = vpop.permute.xlu0 %654
  %658 = vset.pattern.permute.xlu0 0
  %659 = vperm.xlu0 %658, %v589
  %v660 = vpop.permute.xlu0 %659
  %663 = vset.pattern.permute.xlu0 0
  %664 = vperm.xlu0 %663, %v590
  %v665 = vpop.permute.xlu0 %664
  %668 = vset.pattern.permute.xlu0 0
  %669 = vperm.xlu0 %668, %v591
  %v670 = vpop.permute.xlu0 %669
  %672 = vmatpush.msra.mxu0 %v559
  %673 = vmatpush.msra.mxu0 %v558
  %674 = vmatpush.msra.mxu0 %v557
  %675 = vmatpush.msra.mxu0 %v556
  %676 = vmatpush.msra.mxu0 %v555
  %677 = vmatpush.msra.mxu0 %v554
  %678 = vmatpush.msra.mxu0 %v553
  %679 = vmatpush.msra.mxu0 %v552
  %680 = vmatpush.msra.mxu0 %v551
  %681 = vmatpush.msra.mxu0 %v550
  %682 = vmatpush.msra.mxu0 %v549
  %683 = vmatpush.msra.mxu0 %v548
  %684 = vmatpush.msra.mxu0 %v547
  %685 = vmatpush.msra.mxu0 %v546
  %686 = vmatpush.msra.mxu0 %v545
  %687 = vmatpush.msra.mxu0 %v544
  %688 = vmatmul.f32.gmra.mxu0 %v560
  %v689 = vpop.f32.mrf.mxu0
  %v690 = vadd.f32 %v595, %v689
  %691 = vmatmul.f32.gmra.mxu0 %v561
  %v692 = vpop.f32.mrf.mxu0
  %v693 = vadd.f32 %v600, %v692
  %694 = vmatmul.f32.gmra.mxu0 %v562
  %v695 = vpop.f32.mrf.mxu0
  %v696 = vadd.f32 %v605, %v695
  %697 = vmatmul.f32.gmra.mxu0 %v563
  %v698 = vpop.f32.mrf.mxu0
  %v699 = vadd.f32 %v610, %v698
  %700 = vmatmul.f32.gmra.mxu0 %v564
  %v701 = vpop.f32.mrf.mxu0
  %v702 = vadd.f32 %v615, %v701
  %703 = vmatmul.f32.gmra.mxu0 %v565
  %v704 = vpop.f32.mrf.mxu0
  %v705 = vadd.f32 %v620, %v704
  %706 = vmatmul.f32.gmra.mxu0 %v566
  %v707 = vpop.f32.mrf.mxu0
  %v708 = vadd.f32 %v625, %v707
  %709 = vmatmul.f32.gmra.mxu0 %v567
  %v710 = vpop.f32.mrf.mxu0
  %v711 = vadd.f32 %v630, %v710
  %712 = vmatmul.f32.gmra.mxu0 %v568
  %v713 = vpop.f32.mrf.mxu0
  %v714 = vadd.f32 %v635, %v713
  %715 = vmatmul.f32.gmra.mxu0 %v569
  %v716 = vpop.f32.mrf.mxu0
  %v717 = vadd.f32 %v640, %v716
  %718 = vmatmul.f32.gmra.mxu0 %v570
  %v719 = vpop.f32.mrf.mxu0
  %v720 = vadd.f32 %v645, %v719
  %721 = vmatmul.f32.gmra.mxu0 %v571
  %v722 = vpop.f32.mrf.mxu0
  %v723 = vadd.f32 %v650, %v722
  %724 = vmatmul.f32.gmra.mxu0 %v572
  %v725 = vpop.f32.mrf.mxu0
  %v726 = vadd.f32 %v655, %v725
  %727 = vmatmul.f32.gmra.mxu0 %v573
  %v728 = vpop.f32.mrf.mxu0
  %v729 = vadd.f32 %v660, %v728
  %730 = vmatmul.f32.gmra.mxu0 %v574
  %v731 = vpop.f32.mrf.mxu0
  %v732 = vadd.f32 %v665, %v731
  %733 = vmatmul.f32.gmra.mxu0 %v575
  %v734 = vpop.f32.mrf.mxu0
  %v735 = vadd.f32 %v670, %v734
  %736 = vdwg.mxu0
  %v737 = vmax.f32 %v690, 0.0
  %v738 = vmax.f32 %v693, 0.0
  %v739 = vmax.f32 %v696, 0.0
  %v740 = vmax.f32 %v699, 0.0
  %v741 = vmax.f32 %v702, 0.0
  %v742 = vmax.f32 %v705, 0.0
  %v743 = vmax.f32 %v708, 0.0
  %v744 = vmax.f32 %v711, 0.0
  %v745 = vmax.f32 %v714, 0.0
  %v746 = vmax.f32 %v717, 0.0
  %v747 = vmax.f32 %v720, 0.0
  %v748 = vmax.f32 %v723, 0.0
  %v749 = vmax.f32 %v726, 0.0
  %v750 = vmax.f32 %v729, 0.0
  %v751 = vmax.f32 %v732, 0.0
  %v752 = vmax.f32 %v735, 0.0
  %v753 = vld [vmem:[%s5] sm:$0x1]
  %s754 = sld [smem:[#allocation2]]
  %v755 = vstv %s754
  %756 = vmatpush.msra.mxu0 %v752
  %757 = vmatpush.msra.mxu0 %v751
  %758 = vmatpush.msra.mxu0 %v750
  %759 = vmatpush.msra.mxu0 %v749
  %760 = vmatpush.msra.mxu0 %v748
  %761 = vmatpush.msra.mxu0 %v747
  %762 = vmatpush.msra.mxu0 %v746
  %763 = vmatpush.msra.mxu0 %v745
  %764 = vmatpush.msra.mxu0 %v744
  %765 = vmatpush.msra.mxu0 %v743
  %766 = vmatpush.msra.mxu0 %v742
  %767 = vmatpush.msra.mxu0 %v741
  %768 = vmatpush.msra.mxu0 %v740
  %769 = vmatpush.msra.mxu0 %v739
  %770 = vmatpush.msra.mxu0 %v738
  %771 = vmatpush.msra.mxu0 %v737
  %772 = vmatmul.f32.gmra.mxu0 %v753
  %v773 = vpop.f32.mrf.mxu0
  %v774 = vadd.f32 %v755, %v773
  %775 = vdwg.mxu0
  %776 = vst [vmem:[%s7] sm:$0x1] %v774
  // Predicated region
  $region30: #{value_network_forward.1} parent=0 // pred_check
    _
  $region31: #{value_network_forward.1} parent=0 // pred_check_branch
    %778 = sbr.rel (0) target = $region33
  $region32: #{value_network_forward.1} parent=0 // pred_region
    _
  $region33: #{value_network_forward.1} parent=0 // pred_fallthru
    _
  // Predicated region
  $region34: #{value_network_forward.1} parent=0 // pred_check
    _
  $region35: #{value_network_forward.1} parent=0 // pred_check_branch
    %780 = sbr.rel (0) target = $region37
  $region36: #{value_network_forward.1} parent=0 // pred_region
    _
  $region37: #{value_network_forward.1} parent=0 // pred_fallthru
    _

</llo_original>
